<compile_context>
chip_gen: v7x
topology: tpu7x:2x2x1
jax: 0.10.0
libtpu: 0.0.40
codegen_flags: <defaults>
</compile_context>

<pallas_src>
import jax
import jax.numpy as jnp
from jax.experimental import pallas as pl
from jax.experimental.pallas import tpu as pltpu

NEG_SLOPE = 0.01  # F.leaky_relu default


# --------------------------------------------------------------------------
# Fused per-dst-ntype kernel
#   grid: (n_incoming_etypes,)  -- "arbitrary" (reduction) axis
#   refs (per grid step k):
#     feat_s : (Ns_max, in)    bf16   source features of etype k (row-padded)
#     adj    : (Nd, Ns_max)    bf16   dense binary adjacency of etype k
#     w      : (in, out_pad)   bf16   folded per-etype weight
#     b      : (1, out_pad)    f32    folded per-etype bias
#     feat_d : (Nd, in)        bf16   dst features (resident across grid)
#     ws     : (in, out_pad)   bf16   stat weight   (resident)
#     bs     : (1, out_pad)    f32    stat bias     (resident)
#     o      : (Nd, out_pad)   f32    output (written on last step only)
#     acc    : (Nd, out_pad)   f32    VMEM accumulator scratch
# --------------------------------------------------------------------------
def _fused_dst_kernel(feat_s_ref, adj_ref, w_ref, b_ref,
                      feat_d_ref, ws_ref, bs_ref, o_ref, acc_ref):
    k = pl.program_id(0)

    @pl.when(k == 0)
    def _():
        acc_ref[...] = jnp.zeros_like(acc_ref)

    # Per-etype projection with folded basis weights (MXU, bf16 -> f32 acc).
    wh = jnp.dot(feat_s_ref[...], w_ref[...],
                 preferred_element_type=jnp.float32) + b_ref[...]

    adj = adj_ref[...]                                   # bf16 (0/1, exact)
    # In-degree on the XLU while the MXU does A @ Wh.
    deg = jnp.sum(adj.astype(jnp.float32), axis=1, keepdims=True)   # (Nd, 1)
    s = jnp.dot(adj, wh.astype(adj.dtype),
                preferred_element_type=jnp.float32)                  # (Nd, out_pad)
    inv_deg = pl.reciprocal(jnp.maximum(deg, 1.0), approx=True)      # EUP
    # DGL fn.mean semantics: zero-in-degree rows contribute 0.
    acc_ref[...] += jnp.where(deg > 0.0, s * inv_deg, 0.0)

    @pl.when(k == pl.num_programs(0) - 1)
    def _():
        z = (acc_ref[...]
             + jnp.dot(feat_d_ref[...], ws_ref[...],
                       preferred_element_type=jnp.float32)
             + bs_ref[...])
        o_ref[...] = jnp.where(z >= 0.0, z, NEG_SLOPE * z)


# --------------------------------------------------------------------------
# HeteroRGCNLayer forward (basis-decomposition branch)
# --------------------------------------------------------------------------
def hetero_rgcn_layer(feat_dict, params, graph):
    """graph = dict with 'ntypes', 'canonical_etypes', 'adj'[etype]=(Nd,Ns)."""
    ntypes = graph["ntypes"]
    canon = graph["canonical_etypes"]
    base_w, base_b = params["base_w"], params["base_b"]     # (B,in,out), (B,out)
    in_size, out_size = base_w.shape[1], base_w.shape[2]
    out_pad = max(128, ((out_size + 127) // 128) * 128)      # lane-dense output

    # --- fold Conv1d(k=1, in=B, out=1) into per-etype weight/bias (exact) ---
    w_et, b_et = {}, {}
    for _, et, _ in canon:
        coef, cbias = params["conv"][et]                     # (B,), (1,)
        w_et[et] = jnp.einsum("b,bio->io", coef, base_w)     # (in, out)
        b_et[et] = coef @ base_b + cbias[0]                  # (out,)

    def pad_last(x, width):
        return jnp.pad(x, [(0, 0)] * (x.ndim - 1) + [(0, width - x.shape[-1])])

    stat_w_p = pad_last(params["stat_w"], out_pad).astype(jnp.bfloat16)
    stat_b_p = pad_last(params["stat_b"].reshape(1, out_size), out_pad)

    ns_max = max(feat_dict[nt].shape[0] for nt in ntypes)

    out = {}
    for dst in ntypes:
        incoming = [(s, e) for (s, e, d) in canon if d == dst]
        nd = feat_dict[dst].shape[0]
        feat_d = feat_dict[dst].astype(jnp.bfloat16)

        if not incoming:
            # Original DGL code would KeyError here; treat aggregated h as 0.
            z = feat_dict[dst] @ params["stat_w"] + params["stat_b"]
            out[dst] = jnp.where(z >= 0.0, z, NEG_SLOPE * z)
            continue

        n_et = len(incoming)
        # Stack per-etype operands along a leading etype axis (src rows /
        # adjacency columns zero-padded to ns_max; pad nodes contribute 0).
        feats_s = jnp.stack([
            jnp.pad(feat_dict[s], ((0, ns_max - feat_dict[s].shape[0]), (0, 0)))
            for s, e in incoming]).astype(jnp.bfloat16)              # (n_et, Ns_max, in)
        adjs = jnp.stack([
            jnp.pad(graph["adj"][e],
                    ((0, 0), (0, ns_max - graph["adj"][e].shape[1])))
            for s, e in incoming]).astype(jnp.bfloat16)              # (n_et, Nd, Ns_max)
        ws = jnp.stack([pad_last(w_et[e], out_pad)
                        for s, e in incoming]).astype(jnp.bfloat16)  # (n_et, in, out_pad)
        bs = jnp.stack([pad_last(b_et[e].reshape(1, out_size), out_pad)
                        for s, e in incoming]).astype(jnp.float32)   # (n_et, 1, out_pad)

        o = pl.pallas_call(
            _fused_dst_kernel,
            out_shape=jax.ShapeDtypeStruct((nd, out_pad), jnp.float32),
            grid_spec=pltpu.PrefetchScalarGridSpec(
                num_scalar_prefetch=0,
                grid=(n_et,),
                in_specs=[
                    pl.BlockSpec((None, ns_max, in_size), lambda k: (k, 0, 0)),
                    pl.BlockSpec((None, nd, ns_max), lambda k: (k, 0, 0)),
                    pl.BlockSpec((None, in_size, out_pad), lambda k: (k, 0, 0)),
                    pl.BlockSpec((None, 1, out_pad), lambda k: (k, 0, 0)),
                    pl.BlockSpec((nd, in_size), lambda k: (0, 0)),
                    pl.BlockSpec((in_size, out_pad), lambda k: (0, 0)),
                    pl.BlockSpec((1, out_pad), lambda k: (0, 0)),
                ],
                out_specs=pl.BlockSpec((nd, out_pad), lambda k: (0, 0)),
                scratch_shapes=[pltpu.VMEM((nd, out_pad), jnp.float32)],
            ),
            compiler_params=pltpu.CompilerParams(
                dimension_semantics=("arbitrary",)),
        )(feats_s, adjs, ws, bs, feat_d, stat_w_p, stat_b_p)

        out[dst] = o[:, :out_size]
    return out


# --------------------------------------------------------------------------
# Pure-JAX f32 reference for sanity check
# --------------------------------------------------------------------------
def reference(feat_dict, params, graph):
    ntypes = graph["ntypes"]
    num_bases = params["base_w"].shape[0]
    wh_v = {
        nt: jnp.stack(
            [feat_dict[nt] @ params["base_w"][i] + params["base_b"][i]
             for i in range(num_bases)], axis=0)
        for nt in ntypes
    }
    out_size = params["stat_w"].shape[1]
    h = {nt: jnp.zeros((feat_dict[nt].shape[0], out_size), jnp.float32)
         for nt in ntypes}
    for src, etype, dst in graph["canonical_etypes"]:
        coef, cbias = params["conv"][etype]
        wh = jnp.einsum("b,bnd->nd", coef, wh_v[src]) + cbias[0]
        a = graph["adj"][etype]
        deg = a.sum(axis=1, keepdims=True)
        h[dst] = h[dst] + jnp.where(deg > 0, (a @ wh) / jnp.maximum(deg, 1.0), 0.0)
    out = {}
    for nt in ntypes:
        z = h[nt] + feat_dict[nt] @ params["stat_w"] + params["stat_b"]
        out[nt] = jnp.where(z >= 0, z, NEG_SLOPE * z)
    return out


# --------------------------------------------------------------------------
if __name__ == "__main__":
    key = jax.random.PRNGKey(0)

    in_size, out_size = 32, 32
    ntypes = ["user", "item"]
    num_nodes = {"user": 16, "item": 24}
    canonical_etypes = [
        ("user", "e0", "user"),
        ("user", "e1", "item"),
        ("item", "e2", "user"),
        ("item", "e3", "item"),
        ("user", "e4", "item"),
        ("item", "e5", "user"),
    ]
    etypes = [et for _, et, _ in canonical_etypes]
    num_rels = len(etypes)
    num_bases = num_rels // 3  # module default (num_bases=-1) -> 2

    # ---- deterministic parameters (synthetic, not a checkpoint load) ----
    keys = jax.random.split(key, 16)
    base_w = 0.1 * jax.random.normal(keys[0], (num_bases, in_size, out_size), jnp.float32)
    base_b = 0.1 * jax.random.normal(keys[1], (num_bases, out_size), jnp.float32)
    conv = {}
    for i, et in enumerate(etypes):
        ck = jax.random.split(keys[2], num_rels)[i]
        coef = 0.5 * jax.random.normal(ck, (num_bases,), jnp.float32)
        cbias = 0.1 * jax.random.normal(jax.random.fold_in(ck, 1), (1,), jnp.float32)
        conv[et] = (coef, cbias)
    stat_w = 0.1 * jax.random.normal(keys[3], (in_size, out_size), jnp.float32)
    stat_b = 0.1 * jax.random.normal(keys[4], (out_size,), jnp.float32)
    params = {"base_w": base_w, "base_b": base_b, "conv": conv,
              "stat_w": stat_w, "stat_b": stat_b}

    # ---- deterministic node features ----
    feat_dict = {
        "user": jax.random.normal(keys[5], (num_nodes["user"], in_size), jnp.float32),
        "item": jax.random.normal(keys[6], (num_nodes["item"], in_size), jnp.float32),
    }

    # ---- deterministic random graph: dense binary adjacency (dst, src) ----
    adj = {}
    for i, (src, et, dst) in enumerate(canonical_etypes):
        ak = jax.random.fold_in(keys[7], i)
        adj[et] = jax.random.bernoulli(
            ak, 0.3, (num_nodes[dst], num_nodes[src])
        ).astype(jnp.float32)
    graph = {"ntypes": ntypes, "canonical_etypes": canonical_etypes, "adj": adj}

    # ---- run Pallas forward ----
    out = hetero_rgcn_layer(feat_dict, params, graph)
    out = {k: jax.block_until_ready(v) for k, v in out.items()}

    # ---- sanity check vs pure-JAX f32 reference (bf16 matmul operands) ----
    ref = reference(feat_dict, params, graph)
    for nt in ntypes:
        assert out[nt].shape == (num_nodes[nt], out_size)
        assert jnp.allclose(out[nt], ref[nt], atol=2e-2, rtol=2e-2), nt

    print("KERNEL_OK")
</pallas_src>

<mosaic_0001>
module attributes {stable_mosaic.version = 11 : i64} {
  func.func @_fused_dst_kernel(%arg0: i32, %arg1: memref<1x24x32xbf16, #tpu.memory_space<vmem>>, %arg2: memref<1x16x24xbf16, #tpu.memory_space<vmem>>, %arg3: memref<1x32x128xbf16, #tpu.memory_space<vmem>>, %arg4: memref<1x1x128xf32, #tpu.memory_space<vmem>>, %arg5: memref<16x32xbf16, #tpu.memory_space<vmem>>, %arg6: memref<32x128xbf16, #tpu.memory_space<vmem>>, %arg7: memref<1x128xf32, #tpu.memory_space<vmem>>, %arg8: memref<16x128xf32, #tpu.memory_space<vmem>>, %arg9: memref<16x128xf32, #tpu.memory_space<vmem>>) attributes {dimension_semantics = [#tpu.dimension_semantics<arbitrary>], iteration_bounds = array<i64: 3>, scalar_prefetch = 0 : i64, scratch_operands = 1 : i64, tpu.core_type = #tpu.core_type<tc>, window_params = [{transform_indices = @transform_0, window_bounds = array<i64: 1, 24, 32>}, {transform_indices = @transform_1, window_bounds = array<i64: 1, 16, 24>}, {transform_indices = @transform_2, window_bounds = array<i64: 1, 32, 128>}, {transform_indices = @transform_3, window_bounds = array<i64: 1, 1, 128>}, {pipeline_mode = #tpu.pipeline_mode<synchronous>, transform_indices = @transform_4, window_bounds = array<i64: 16, 32>}, {pipeline_mode = #tpu.pipeline_mode<synchronous>, transform_indices = @transform_5, window_bounds = array<i64: 32, 128>}, {pipeline_mode = #tpu.pipeline_mode<synchronous>, transform_indices = @transform_6, window_bounds = array<i64: 1, 128>}, {pipeline_mode = #tpu.pipeline_mode<synchronous>, transform_indices = @transform_7, window_bounds = array<i64: 16, 128>}]} {
    %c0_i32 = arith.constant 0 : i32
    %0 = arith.cmpi eq, %arg0, %c0_i32 : i32
    %1 = arith.extui %0 : i1 to i32
    %c0_i32_0 = arith.constant 0 : i32
    %2 = arith.cmpi ne, %1, %c0_i32_0 : i32
    scf.if %2 {
      %cst_22 = arith.constant 0.000000e+00 : f32
      %36 = vector.broadcast %cst_22 : f32 to vector<16x128xf32>
      %c0_23 = arith.constant 0 : index
      %c0_24 = arith.constant 0 : index
      %37 = vector.load %arg9[%c0_23, %c0_24] : memref<16x128xf32, #tpu.memory_space<vmem>>, vector<16x128xf32>
      tpu.vector_store %arg9[%c0_23, %c0_24], %36 {strides = array<i32>} : memref<16x128xf32, #tpu.memory_space<vmem>>, vector<16x128xf32>,
    } else {
    }
    %c0 = arith.constant 0 : index
    %c0_1 = arith.constant 0 : index
    %c0_2 = arith.constant 0 : index
    %3 = vector.load %arg1[%c0, %c0_1, %c0_2] : memref<1x24x32xbf16, #tpu.memory_space<vmem>>, vector<1x24x32xbf16>
    %4 = vector.shape_cast %3 : vector<1x24x32xbf16> to vector<24x32xbf16>
    %c0_3 = arith.constant 0 : index
    %c0_4 = arith.constant 0 : index
    %c0_5 = arith.constant 0 : index
    %5 = vector.load %arg3[%c0_3, %c0_4, %c0_5] : memref<1x32x128xbf16, #tpu.memory_space<vmem>>, vector<1x32x128xbf16>
    %6 = vector.shape_cast %5 : vector<1x32x128xbf16> to vector<32x128xbf16>
    %cst = arith.constant dense<0.000000e+00> : vector<24x128xf32>
    %7 = tpu.matmul %4, %6, %cst {dimension_numbers = #tpu.dot_dimension_numbers<[1], [0], [0], [1], [0, 0, 1, 1], [], []>} : vector<24x32xbf16>, vector<32x128xbf16>, vector<24x128xf32> -> vector<24x128xf32>
    %c0_6 = arith.constant 0 : index
    %c0_7 = arith.constant 0 : index
    %c0_8 = arith.constant 0 : index
    %8 = vector.load %arg4[%c0_6, %c0_7, %c0_8] : memref<1x1x128xf32, #tpu.memory_space<vmem>>, vector<1x1x128xf32>
    %9 = vector.shape_cast %8 : vector<1x1x128xf32> to vector<1x128xf32>
    %10 = vector.broadcast %9 : vector<1x128xf32> to vector<24x128xf32>
    %11 = arith.addf %7, %10 : vector<24x128xf32>
    %c0_9 = arith.constant 0 : index
    %c0_10 = arith.constant 0 : index
    %c0_11 = arith.constant 0 : index
    %12 = vector.load %arg2[%c0_9, %c0_10, %c0_11] : memref<1x16x24xbf16, #tpu.memory_space<vmem>>, vector<1x16x24xbf16>
    %13 = vector.shape_cast %12 : vector<1x16x24xbf16> to vector<16x24xbf16>
    %14 = arith.extf %13 : vector<16x24xbf16> to vector<16x24xf32>
    %cst_12 = arith.constant dense<0.000000e+00> : vector<16xf32>
    %15 = vector.multi_reduction <add>, %14, %cst_12 [1] : vector<16x24xf32> to vector<16xf32>
    %16 = vector.shape_cast %15 : vector<16xf32> to vector<16x1xf32>
    %17 = arith.truncf %11 : vector<24x128xf32> to vector<24x128xbf16>
    %cst_13 = arith.constant dense<0.000000e+00> : vector<16x128xf32>
    %18 = tpu.matmul %13, %17, %cst_13 {dimension_numbers = #tpu.dot_dimension_numbers<[1], [0], [0], [1], [0, 0, 1, 1], [], []>} : vector<16x24xbf16>, vector<24x128xbf16>, vector<16x128xf32> -> vector<16x128xf32>
    %cst_14 = arith.constant 1.000000e+00 : f32
    %19 = vector.broadcast %cst_14 : f32 to vector<16x1xf32>
    %20 = arith.maximumf %16, %19 : vector<16x1xf32>
    %21 = tpu.reciprocal %20 {approx = true} : vector<16x1xf32> -> vector<16x1xf32>
    %c0_15 = arith.constant 0 : index
    %c0_16 = arith.constant 0 : index
    %22 = vector.load %arg9[%c0_15, %c0_16] : memref<16x128xf32, #tpu.memory_space<vmem>>, vector<16x128xf32>
    %cst_17 = arith.constant 0.000000e+00 : f32
    %23 = vector.broadcast %cst_17 : f32 to vector<16x1xf32>
    %24 = arith.cmpf ogt, %16, %23 : vector<16x1xf32>
    %25 = vector.broadcast %21 : vector<16x1xf32> to vector<16x128xf32>
    %26 = arith.mulf %18, %25 : vector<16x128xf32>
    %cst_18 = arith.constant 0.000000e+00 : f32
    %27 = vector.shape_cast %24 : vector<16x1xi1> to vector<16x1xi1>
    %28 = vector.broadcast %27 : vector<16x1xi1> to vector<16x128xi1>
    %29 = vector.broadcast %cst_18 : f32 to vector<16x128xf32>
    %30 = arith.select %28, %26, %29 : vector<16x128xi1>, vector<16x128xf32>
    %31 = arith.addf %22, %30 : vector<16x128xf32>
    %c0_19 = arith.constant 0 : index
    %c0_20 = arith.constant 0 : index
    %32 = vector.load %arg9[%c0_19, %c0_20] : memref<16x128xf32, #tpu.memory_space<vmem>>, vector<16x128xf32>
    tpu.vector_store %arg9[%c0_19, %c0_20], %31 {strides = array<i32>} : memref<16x128xf32, #tpu.memory_space<vmem>>, vector<16x128xf32>,
    %c2_i32 = arith.constant 2 : i32
    %33 = arith.cmpi eq, %arg0, %c2_i32 : i32
    %34 = arith.extui %33 : i1 to i32
    %c0_i32_21 = arith.constant 0 : i32
    %35 = arith.cmpi ne, %34, %c0_i32_21 : i32
    scf.if %35 {
      %c0_22 = arith.constant 0 : index
      %c0_23 = arith.constant 0 : index
      %36 = vector.load %arg9[%c0_22, %c0_23] : memref<16x128xf32, #tpu.memory_space<vmem>>, vector<16x128xf32>
      %c0_24 = arith.constant 0 : index
      %c0_25 = arith.constant 0 : index
      %37 = vector.load %arg5[%c0_24, %c0_25] : memref<16x32xbf16, #tpu.memory_space<vmem>>, vector<16x32xbf16>
      %c0_26 = arith.constant 0 : index
      %c0_27 = arith.constant 0 : index
      %38 = vector.load %arg6[%c0_26, %c0_27] : memref<32x128xbf16, #tpu.memory_space<vmem>>, vector<32x128xbf16>
      %cst_28 = arith.constant dense<0.000000e+00> : vector<16x128xf32>
      %39 = tpu.matmul %37, %38, %cst_28 {dimension_numbers = #tpu.dot_dimension_numbers<[1], [0], [0], [1], [0, 0, 1, 1], [], []>} : vector<16x32xbf16>, vector<32x128xbf16>, vector<16x128xf32> -> vector<16x128xf32>
      %40 = arith.addf %36, %39 : vector<16x128xf32>
      %c0_29 = arith.constant 0 : index
      %c0_30 = arith.constant 0 : index
      %41 = vector.load %arg7[%c0_29, %c0_30] : memref<1x128xf32, #tpu.memory_space<vmem>>, vector<1x128xf32>
      %42 = vector.broadcast %41 : vector<1x128xf32> to vector<16x128xf32>
      %43 = arith.addf %40, %42 : vector<16x128xf32>
      %cst_31 = arith.constant 0.000000e+00 : f32
      %44 = vector.broadcast %cst_31 : f32 to vector<16x128xf32>
      %45 = arith.cmpf oge, %43, %44 : vector<16x128xf32>
      %cst_32 = arith.constant 0.00999999977 : f32
      %46 = vector.broadcast %cst_32 : f32 to vector<16x128xf32>
      %47 = arith.mulf %46, %43 : vector<16x128xf32>
      %48 = arith.select %45, %43, %47 : vector<16x128xi1>, vector<16x128xf32>
      %c0_33 = arith.constant 0 : index
      %c0_34 = arith.constant 0 : index
      %49 = vector.load %arg8[%c0_33, %c0_34] : memref<16x128xf32, #tpu.memory_space<vmem>>, vector<16x128xf32>
      tpu.vector_store %arg8[%c0_33, %c0_34], %48 {strides = array<i32>} : memref<16x128xf32, #tpu.memory_space<vmem>>, vector<16x128xf32>,
    } else {
    }
    return
  }
  func.func @transform_0(%arg0: i32) -> (i32, i32, i32) {
    %c0_i32 = arith.constant 0 : i32
    %c0_i32_0 = arith.constant 0 : i32
    %c0_i32_1 = arith.constant 0 : i32
    return %arg0, %c0_i32, %c0_i32_0 : i32, i32, i32
  }
  func.func @transform_1(%arg0: i32) -> (i32, i32, i32) {
    %c0_i32 = arith.constant 0 : i32
    %c0_i32_0 = arith.constant 0 : i32
    %c0_i32_1 = arith.constant 0 : i32
    return %arg0, %c0_i32, %c0_i32_0 : i32, i32, i32
  }
  func.func @transform_2(%arg0: i32) -> (i32, i32, i32) {
    %c0_i32 = arith.constant 0 : i32
    %c0_i32_0 = arith.constant 0 : i32
    %c0_i32_1 = arith.constant 0 : i32
    return %arg0, %c0_i32, %c0_i32_0 : i32, i32, i32
  }
  func.func @transform_3(%arg0: i32) -> (i32, i32, i32) {
    %c0_i32 = arith.constant 0 : i32
    %c0_i32_0 = arith.constant 0 : i32
    %c0_i32_1 = arith.constant 0 : i32
    return %arg0, %c0_i32, %c0_i32_0 : i32, i32, i32
  }
  func.func @transform_4(%arg0: i32) -> (i32, i32) {
    %c0_i32 = arith.constant 0 : i32
    %c0_i32_0 = arith.constant 0 : i32
    %c0_i32_1 = arith.constant 0 : i32
    return %c0_i32, %c0_i32_0 : i32, i32
  }
  func.func @transform_5(%arg0: i32) -> (i32, i32) {
    %c0_i32 = arith.constant 0 : i32
    %c0_i32_0 = arith.constant 0 : i32
    %c0_i32_1 = arith.constant 0 : i32
    return %c0_i32, %c0_i32_0 : i32, i32
  }
  func.func @transform_6(%arg0: i32) -> (i32, i32) {
    %c0_i32 = arith.constant 0 : i32
    %c0_i32_0 = arith.constant 0 : i32
    %c0_i32_1 = arith.constant 0 : i32
    return %c0_i32, %c0_i32_0 : i32, i32
  }
  func.func @transform_7(%arg0: i32) -> (i32, i32) {
    %c0_i32 = arith.constant 0 : i32
    %c0_i32_0 = arith.constant 0 : i32
    %c0_i32_1 = arith.constant 0 : i32
    return %c0_i32, %c0_i32_0 : i32, i32
  }
}

</mosaic_0001>

<llo_original>
// kernel: tpu_custom_call.1
$region0: #{tpu_custom_call.1}
  #allocation0 [shape = 'u32[]', space=smem, size = 0x4, offset = 0x4, fixed_abs, tag = 'smem constant byte address 0x4 - core index']
  #allocation1 [shape = 'u32[144,128]{1,0:T(1,128)}', space=vmem, size = 0x12000, scoped, tag = 'internal scratch']
  #allocation2 [shape = 'f32[16,128]{1,0:T(8,128)}', space=vmem, size = 0x2000, scoped, tag = 'scratch operand']
  %s0 = inlined_call_operand.hbm [shape: bf16[3,24,32], index: 0, kind: input, shape index: {}]
  %s1 = inlined_call_operand.hbm [shape: bf16[3,16,24], index: 1, kind: input, shape index: {}]
  %s2 = inlined_call_operand.hbm [shape: bf16[3,32,128], index: 2, kind: input, shape index: {}]
  %s3 = inlined_call_operand.hbm [shape: f32[3,1,128], index: 3, kind: input, shape index: {}]
  %s4 = inlined_call_operand.hbm [shape: bf16[16,32], index: 4, kind: input, shape index: {}]
  %s5 = inlined_call_operand.vmem [shape: bf16[32,128], index: 5, kind: input, shape index: {}]
  %s6 = inlined_call_operand.vmem [shape: f32[1,128], index: 6, kind: input, shape index: {}]
  %s7 = inlined_call_operand.hbm [shape: f32[16,128], index: 7, kind: output, shape index: {}]
  %s8 = sld [smem:[#allocation0]]
  $region89: #{tpu_custom_call.1} parent=0
    _
  %s10 = ssub.s32 1, %s8
  %s11 = scalar_select 0, %s10, %s8
  $region1: #{tpu_custom_call.1} parent=0
    #allocation3 [shape = 'u8[12288]{0}', space=vmem, size = 0x3000, scoped, tag = 'input window, operand 0']
    #allocation4 [shape = 's32[2]{0}', space=sflag, size = 0x8, scoped, tag = 'scoped memory for tpu_custom_call.1']
    #allocation5 [shape = 's32[2]{0}', space=sflag, size = 0x8, scoped, tag = 'scoped memory for tpu_custom_call.1']
    #allocation6 [shape = 'u8[8192]{0}', space=vmem, size = 0x2000, scoped, tag = 'input window, operand 1']
    #allocation7 [shape = 's32[2]{0}', space=sflag, size = 0x8, scoped, tag = 'scoped memory for tpu_custom_call.1']
    #allocation8 [shape = 'u8[16384]{0}', space=vmem, size = 0x4000, scoped, tag = 'input window, operand 2']
    #allocation9 [shape = 'u8[1024]{0}', space=vmem, size = 0x400, scoped, tag = 'input window, operand 3']
    #allocation10 [shape = 's32[2]{0}', space=sflag, size = 0x8, scoped, tag = 'scoped memory for tpu_custom_call.1']
    #allocation11 [shape = 'u8[4096]{0}', space=vmem, size = 0x1000, scoped, tag = 'input window, operand 4, single buffered']
    #allocation12 [shape = 'u8[8192]{0}', space=vmem, size = 0x2000, scoped, tag = 'output window, operand 0, single buffered']
    %12 = vsyncpa [#allocation4], 0
    %s13 = scalar_lea.sflag [#allocation4], 1
    %14 = vsyncpa %s13, 0
    %15 = vsyncpa [#allocation7], 0
    %s16 = scalar_lea.sflag [#allocation7], 1
    %17 = vsyncpa %s16, 0
    %18 = vsyncpa [#allocation10], 0
    %s19 = scalar_lea.sflag [#allocation10], 1
    %20 = vsyncpa %s19, 0
    %21 = vsyncpa [#allocation5], 0
    loop: start=0, step=1, limit=5
    $region2: #{tpu_custom_call.1} parent=1 // loop_pre_header
      _
    $region3: #{tpu_custom_call.1} parent=1 // loop_header
      %s23 = sphi 0, %s27
      %p24 = scmp.ge.s32.totalorder %s23, 5
      %s33 = sphi 0, %s35
      %s36 = sphi 0, %s33
      %s37 = sphi 0, %s36
      %s53 = sphi 0, %s37
      %s59 = sphi 0, %s61
      %s62 = sphi 0, %s59
      %s63 = sphi 0, %s62
      %s79 = sphi 0, %s63
      %s85 = sphi 0, %s87
      %s88 = sphi 0, %s85
      %s89 = sphi 0, %s88
      %s105 = sphi 0, %s89
      %s111 = sphi 0, %s113
      %s114 = sphi 0, %s111
      %s115 = sphi 0, %s114
      %s131 = sphi 0, %s115
      %s135 = sphi 0, %s135
      %s137 = sphi 0, %s135
      %s138 = sphi 0, %s137
      %s152 = sphi 0, %s138
      %s156 = sphi 0, %s156
      %s158 = sphi 0, %s156
      %s159 = sphi 0, %s158
      %s173 = sphi 0, %s159
      %s177 = sphi 0, %s177
      %s179 = sphi 0, %s177
      %s180 = sphi 0, %s179
      %s194 = sphi 0, %s180
      %s198 = sphi 0, %s198
      %s200 = sphi 0, %s198
      %s201 = sphi 0, %s200
      %s215 = sphi 0, %s201
    $region4: #{tpu_custom_call.1} parent=1 // loop_header_branch
      %26 = sbr.rel (%p24) target = $region8
    $region5: #{tpu_custom_call.1} parent=1 // loop_body
      %s28 = ssub.s32 %s23, 1
      %s29 = ssub.s32 %s23, 2
      %s30 = sadd.s32 %s23, 1
      %s31 = ssub.s32 %s23, %s30
      %p32 = scmp.eq.s32.totalorder %s31, 0
      %s34 = sadd.s32 %s33, 1
      %s35 = scalar_select %p32, %s33, %s34
      %p38 = pneg %p32
      %p39 = scmp.eq.s32.totalorder %s23, 2
      %p40 = por %p38, %p39
      %p41 = scmp.ne.s32.totalorder %s33, %s36
      %p42 = scmp.eq.s32.totalorder %s23, 0
      %p43 = por %p41, %p42
      %p44 = scmp.ne.s32.totalorder %s33, %s36
      %p45 = scmp.eq.s32.totalorder %s28, 2
      %p46 = por %p44, %p45
      %p47 = scmp.ne.s32.totalorder %s36, %s37
      %p48 = scmp.eq.s32.totalorder %s28, 0
      %p49 = por %p47, %p48
      %p50 = scmp.ne.s32.totalorder %s36, %s37
      %p51 = scmp.eq.s32.totalorder %s29, 2
      %p52 = por %p50, %p51
      %p54 = scmp.ne.s32.totalorder %s37, %s53
      %p55 = scmp.eq.s32.totalorder %s29, 0
      %p56 = por %p54, %p55
      %s57 = ssub.s32 %s23, %s30
      %p58 = scmp.eq.s32.totalorder %s57, 0
      %s60 = sadd.s32 %s59, 1
      %s61 = scalar_select %p58, %s59, %s60
      %p64 = pneg %p58
      %p65 = scmp.eq.s32.totalorder %s23, 2
      %p66 = por %p64, %p65
      %p67 = scmp.ne.s32.totalorder %s59, %s62
      %p68 = scmp.eq.s32.totalorder %s23, 0
      %p69 = por %p67, %p68
      %p70 = scmp.ne.s32.totalorder %s59, %s62
      %p71 = scmp.eq.s32.totalorder %s28, 2
      %p72 = por %p70, %p71
      %p73 = scmp.ne.s32.totalorder %s62, %s63
      %p74 = scmp.eq.s32.totalorder %s28, 0
      %p75 = por %p73, %p74
      %p76 = scmp.ne.s32.totalorder %s62, %s63
      %p77 = scmp.eq.s32.totalorder %s29, 2
      %p78 = por %p76, %p77
      %p80 = scmp.ne.s32.totalorder %s63, %s79
      %p81 = scmp.eq.s32.totalorder %s29, 0
      %p82 = por %p80, %p81
      %s83 = ssub.s32 %s23, %s30
      %p84 = scmp.eq.s32.totalorder %s83, 0
      %s86 = sadd.s32 %s85, 1
      %s87 = scalar_select %p84, %s85, %s86
      %p90 = pneg %p84
      %p91 = scmp.eq.s32.totalorder %s23, 2
      %p92 = por %p90, %p91
      %p93 = scmp.ne.s32.totalorder %s85, %s88
      %p94 = scmp.eq.s32.totalorder %s23, 0
      %p95 = por %p93, %p94
      %p96 = scmp.ne.s32.totalorder %s85, %s88
      %p97 = scmp.eq.s32.totalorder %s28, 2
      %p98 = por %p96, %p97
      %p99 = scmp.ne.s32.totalorder %s88, %s89
      %p100 = scmp.eq.s32.totalorder %s28, 0
      %p101 = por %p99, %p100
      %p102 = scmp.ne.s32.totalorder %s88, %s89
      %p103 = scmp.eq.s32.totalorder %s29, 2
      %p104 = por %p102, %p103
      %p106 = scmp.ne.s32.totalorder %s89, %s105
      %p107 = scmp.eq.s32.totalorder %s29, 0
      %p108 = por %p106, %p107
      %s109 = ssub.s32 %s23, %s30
      %p110 = scmp.eq.s32.totalorder %s109, 0
      %s112 = sadd.s32 %s111, 1
      %s113 = scalar_select %p110, %s111, %s112
      %p116 = pneg %p110
      %p117 = scmp.eq.s32.totalorder %s23, 2
      %p118 = por %p116, %p117
      %p119 = scmp.ne.s32.totalorder %s111, %s114
      %p120 = scmp.eq.s32.totalorder %s23, 0
      %p121 = por %p119, %p120
      %p122 = scmp.ne.s32.totalorder %s111, %s114
      %p123 = scmp.eq.s32.totalorder %s28, 2
      %p124 = por %p122, %p123
      %p125 = scmp.ne.s32.totalorder %s114, %s115
      %p126 = scmp.eq.s32.totalorder %s28, 0
      %p127 = por %p125, %p126
      %p128 = scmp.ne.s32.totalorder %s114, %s115
      %p129 = scmp.eq.s32.totalorder %s29, 2
      %p130 = por %p128, %p129
      %p132 = scmp.ne.s32.totalorder %s115, %s131
      %p133 = scmp.eq.s32.totalorder %s29, 0
      %p134 = por %p132, %p133
      %s136 = sadd.s32 %s135, 1
      %p139 = scmp.eq.s32.totalorder %s23, 2
      %p140 = scmp.ne.s32.totalorder %s135, %s137
      %p141 = scmp.eq.s32.totalorder %s23, 0
      %p142 = por %p140, %p141
      %p143 = scmp.ne.s32.totalorder %s135, %s137
      %p144 = scmp.eq.s32.totalorder %s28, 2
      %p145 = por %p143, %p144
      %p146 = scmp.ne.s32.totalorder %s137, %s138
      %p147 = scmp.eq.s32.totalorder %s28, 0
      %p148 = por %p146, %p147
      %p149 = scmp.ne.s32.totalorder %s137, %s138
      %p150 = scmp.eq.s32.totalorder %s29, 2
      %p151 = por %p149, %p150
      %p153 = scmp.ne.s32.totalorder %s138, %s152
      %p154 = scmp.eq.s32.totalorder %s29, 0
      %p155 = por %p153, %p154
      %s157 = sadd.s32 %s156, 1
      %p160 = scmp.eq.s32.totalorder %s23, 2
      %p161 = scmp.ne.s32.totalorder %s156, %s158
      %p162 = scmp.eq.s32.totalorder %s23, 0
      %p163 = por %p161, %p162
      %p164 = scmp.ne.s32.totalorder %s156, %s158
      %p165 = scmp.eq.s32.totalorder %s28, 2
      %p166 = por %p164, %p165
      %p167 = scmp.ne.s32.totalorder %s158, %s159
      %p168 = scmp.eq.s32.totalorder %s28, 0
      %p169 = por %p167, %p168
      %p170 = scmp.ne.s32.totalorder %s158, %s159
      %p171 = scmp.eq.s32.totalorder %s29, 2
      %p172 = por %p170, %p171
      %p174 = scmp.ne.s32.totalorder %s159, %s173
      %p175 = scmp.eq.s32.totalorder %s29, 0
      %p176 = por %p174, %p175
      %s178 = sadd.s32 %s177, 1
      %p181 = scmp.eq.s32.totalorder %s23, 2
      %p182 = scmp.ne.s32.totalorder %s177, %s179
      %p183 = scmp.eq.s32.totalorder %s23, 0
      %p184 = por %p182, %p183
      %p185 = scmp.ne.s32.totalorder %s177, %s179
      %p186 = scmp.eq.s32.totalorder %s28, 2
      %p187 = por %p185, %p186
      %p188 = scmp.ne.s32.totalorder %s179, %s180
      %p189 = scmp.eq.s32.totalorder %s28, 0
      %p190 = por %p188, %p189
      %p191 = scmp.ne.s32.totalorder %s179, %s180
      %p192 = scmp.eq.s32.totalorder %s29, 2
      %p193 = por %p191, %p192
      %p195 = scmp.ne.s32.totalorder %s180, %s194
      %p196 = scmp.eq.s32.totalorder %s29, 0
      %p197 = por %p195, %p196
      %s199 = sadd.s32 %s198, 1
      %p202 = scmp.eq.s32.totalorder %s23, 2
      %p203 = scmp.ne.s32.totalorder %s198, %s200
      %p204 = scmp.eq.s32.totalorder %s23, 0
      %p205 = por %p203, %p204
      %p206 = scmp.ne.s32.totalorder %s198, %s200
      %p207 = scmp.eq.s32.totalorder %s28, 2
      %p208 = por %p206, %p207
      %p209 = scmp.ne.s32.totalorder %s200, %s201
      %p210 = scmp.eq.s32.totalorder %s28, 0
      %p211 = por %p209, %p210
      %p212 = scmp.ne.s32.totalorder %s200, %s201
      %p213 = scmp.eq.s32.totalorder %s29, 2
      %p214 = por %p212, %p213
      %p216 = scmp.ne.s32.totalorder %s201, %s215
      %p217 = scmp.eq.s32.totalorder %s29, 0
      %p218 = por %p216, %p217
      %p219 = scmp.le.s32.totalorder 1, %s23
      %p220 = scmp.lt.s32.totalorder %s23, 4
      %p221 = pnand %p219, %p220
      %p222 = pneg %p221
      // Predicated region
      $region9: #{tpu_custom_call.1} parent=5 // pred_check
        _
      $region10: #{tpu_custom_call.1} parent=5 // pred_check_branch
        %224 = sbr.rel (%p221) target = $region12
      $region11: #{tpu_custom_call.1} parent=5 // pred_region
        %s225 = ssub.s32 %s23, 1
        // Predicated region
        $region13: #{tpu_custom_call.1} parent=11 // pred_check
          %p226 = pneg %p148
        $region14: #{tpu_custom_call.1} parent=11 // pred_check_branch
          %228 = sbr.rel (%p226) target = $region16
        $region15: #{tpu_custom_call.1} parent=11 // pred_region
          %s230 = ssub.s32 128, 128
          %231 = vsyncadd [#allocation10], %s230
          %s232 = sshll.u32 [#allocation11], 4
          %s233 = int_to_ptr.vmem [resolvable:$true] %s232
          %238 = dma.hbm_to_vmem [thread:$0]  %s4, 128, %s233, [#allocation10], 64, 64, 4
        $region16: #{tpu_custom_call.1} parent=11 // pred_fallthru
          _
        // Predicated region
        $region17: #{tpu_custom_call.1} parent=11 // pred_check
          %p239 = pneg %p169
        $region18: #{tpu_custom_call.1} parent=11 // pred_check_branch
          %241 = sbr.rel (%p239) target = $region20
        $region19: #{tpu_custom_call.1} parent=11 // pred_region
          _
        $region20: #{tpu_custom_call.1} parent=11 // pred_fallthru
          _
        // Predicated region
        $region21: #{tpu_custom_call.1} parent=11 // pred_check
          %p242 = pneg %p190
        $region22: #{tpu_custom_call.1} parent=11 // pred_check_branch
          %244 = sbr.rel (%p242) target = $region24
        $region23: #{tpu_custom_call.1} parent=11 // pred_region
          _
        $region24: #{tpu_custom_call.1} parent=11 // pred_fallthru
          _
      $region12: #{tpu_custom_call.1} parent=5 // pred_fallthru
        _
      %p245 = scmp.lt.s32.totalorder %s23, 3
      // Predicated region
      $region25: #{tpu_custom_call.1} parent=5 // pred_check
        %p246 = pneg %p245
      $region26: #{tpu_custom_call.1} parent=5 // pred_check_branch
        %248 = sbr.rel (%p246) target = $region28
      $region27: #{tpu_custom_call.1} parent=5 // pred_region
        // Predicated region
        $region29: #{tpu_custom_call.1} parent=27 // pred_check
          %p249 = pneg %p43
        $region30: #{tpu_custom_call.1} parent=27 // pred_check_branch
          %251 = sbr.rel (%p249) target = $region32
        $region31: #{tpu_custom_call.1} parent=27 // pred_region
          %s252 = sand.u32 %s33, 1
          %s253 = scalar_lea.sflag [#allocation4], %s252
          %s254 = sand.u32 %s33, 1
          %s255 = smul.addr %s254, 12
          %s256 = scalar_lea.vmem [#allocation3], %s255
          %s258 = ssub.s32 192, 192
          %259 = vsyncadd %s253, %s258
          %s260 = smul.addr %s23, 3
          %s261 = smul.addr %s260, 64
          %s262 = scalar_lea.hbm %s0, %s261
          %s263 = sshll.u32 %s256, 4
          %s264 = int_to_ptr.vmem [resolvable:$true] %s263
          %269 = dma.hbm_to_vmem [thread:$0]  %s262, 192, %s264, %s253, 64, 64, 4
        $region32: #{tpu_custom_call.1} parent=27 // pred_fallthru
          _
        // Predicated region
        $region33: #{tpu_custom_call.1} parent=27 // pred_check
          %p270 = pneg %p69
        $region34: #{tpu_custom_call.1} parent=27 // pred_check_branch
          %272 = sbr.rel (%p270) target = $region36
        $region35: #{tpu_custom_call.1} parent=27 // pred_region
          %s273 = sand.u32 %s23, 1
          %s274 = scalar_lea.sflag [#allocation7], %s273
          %s275 = sand.u32 %s59, 1
          %s276 = smul.addr %s275, 8
          %s277 = scalar_lea.vmem [#allocation6], %s276
          %s279 = ssub.s32 128, 128
          %280 = vsyncadd %s274, %s279
          %s281 = smul.addr %s23, 2
          %s282 = smul.addr %s281, 64
          %s283 = scalar_lea.hbm %s1, %s282
          %s284 = sshll.u32 %s277, 4
          %s285 = int_to_ptr.vmem [resolvable:$true] %s284
          %290 = dma.hbm_to_vmem [thread:$0]  %s283, 128, %s285, %s274, 64, 64, 4
        $region36: #{tpu_custom_call.1} parent=27 // pred_fallthru
          _
        // Predicated region
        $region37: #{tpu_custom_call.1} parent=27 // pred_check
          %p291 = pneg %p95
        $region38: #{tpu_custom_call.1} parent=27 // pred_check_branch
          %293 = sbr.rel (%p291) target = $region40
        $region39: #{tpu_custom_call.1} parent=27 // pred_region
          %s294 = sand.u32 %s23, 1
          %s295 = scalar_lea.sflag [#allocation7], %s294
          %s296 = sand.u32 %s85, 1
          %s297 = smul.addr %s296, 16
          %s298 = scalar_lea.vmem [#allocation8], %s297
          %s300 = ssub.s32 256, 256
          %301 = vsyncadd %s295, %s300
          %s302 = smul.addr %s23, 4
          %s303 = smul.addr %s302, 64
          %s304 = scalar_lea.hbm %s2, %s303
          %s305 = sshll.u32 %s298, 4
          %s306 = int_to_ptr.vmem [resolvable:$true] %s305
          %311 = dma.hbm_to_vmem [thread:$0]  %s304, 256, %s306, %s295, 64, 64, 4
        $region40: #{tpu_custom_call.1} parent=27 // pred_fallthru
          _
        // Predicated region
        $region41: #{tpu_custom_call.1} parent=27 // pred_check
          %p312 = pneg %p121
        $region42: #{tpu_custom_call.1} parent=27 // pred_check_branch
          %314 = sbr.rel (%p312) target = $region44
        $region43: #{tpu_custom_call.1} parent=27 // pred_region
          %s315 = sand.u32 %s23, 1
          %s316 = scalar_lea.sflag [#allocation10], %s315
          %s317 = sand.u32 %s111, 1
          %s318 = scalar_lea.vmem [#allocation9], %s317
          %s320 = ssub.s32 16, 16
          %321 = vsyncadd %s316, %s320
          %s322 = smul.addr %s23, 16
          %s323 = scalar_lea.hbm %s3, %s322
          %s325 = sshll.u32 %s318, 4
          %s326 = int_to_ptr.vmem [resolvable:$true] %s325
          %328 = dma.hbm_to_vmem [thread:$0]  %s323, 16, %s326, %s316
        $region44: #{tpu_custom_call.1} parent=27 // pred_fallthru
          _
      $region28: #{tpu_custom_call.1} parent=5 // pred_fallthru
        _
      %p329 = scmp.le.s32.totalorder 1, %s23
      %p330 = scmp.lt.s32.totalorder %s23, 4
      %p331 = pnand %p329, %p330
      %p332 = pneg %p331
      // Predicated region
      $region45: #{tpu_custom_call.1} parent=5 // pred_check
        _
      $region46: #{tpu_custom_call.1} parent=5 // pred_check_branch
        %334 = sbr.rel (%p331) target = $region48
      $region47: #{tpu_custom_call.1} parent=5 // pred_region
        %s335 = ssub.s32 %s23, 1
        %s336 = sand.u32 %s36, 1
        %s337 = scalar_lea.sflag [#allocation4], %s336
        %s338 = sand.u32 %s36, 1
        %s339 = smul.addr %s338, 12
        %s340 = scalar_lea.vmem [#allocation3], %s339
        // Predicated region
        $region49: #{tpu_custom_call.1} parent=47 // pred_check
          %p341 = pneg %p49
        $region50: #{tpu_custom_call.1} parent=47 // pred_check_branch
          %343 = sbr.rel (%p341) target = $region52
        $region51: #{tpu_custom_call.1} parent=47 // pred_region
          %344 = dma.done %s337, 192
        $region52: #{tpu_custom_call.1} parent=47 // pred_fallthru
          _
        %s345 = sand.u32 %s28, 1
        %s346 = scalar_lea.sflag [#allocation7], %s345
        %s347 = sand.u32 %s62, 1
        %s348 = smul.addr %s347, 8
        %s349 = scalar_lea.vmem [#allocation6], %s348
        // Predicated region
        $region53: #{tpu_custom_call.1} parent=47 // pred_check
          %p350 = pneg %p75
        $region54: #{tpu_custom_call.1} parent=47 // pred_check_branch
          %352 = sbr.rel (%p350) target = $region56
        $region55: #{tpu_custom_call.1} parent=47 // pred_region
          %353 = dma.done %s346, 128
        $region56: #{tpu_custom_call.1} parent=47 // pred_fallthru
          _
        %s354 = sand.u32 %s28, 1
        %s355 = scalar_lea.sflag [#allocation7], %s354
        %s356 = sand.u32 %s88, 1
        %s357 = smul.addr %s356, 16
        %s358 = scalar_lea.vmem [#allocation8], %s357
        // Predicated region
        $region57: #{tpu_custom_call.1} parent=47 // pred_check
          %p359 = pneg %p101
        $region58: #{tpu_custom_call.1} parent=47 // pred_check_branch
          %361 = sbr.rel (%p359) target = $region60
        $region59: #{tpu_custom_call.1} parent=47 // pred_region
          %362 = dma.done %s355, 256
        $region60: #{tpu_custom_call.1} parent=47 // pred_fallthru
          _
        %s363 = sand.u32 %s28, 1
        %s364 = scalar_lea.sflag [#allocation10], %s363
        %s365 = sand.u32 %s114, 1
        %s366 = scalar_lea.vmem [#allocation9], %s365
        // Predicated region
        $region61: #{tpu_custom_call.1} parent=47 // pred_check
          %p367 = pneg %p127
        $region62: #{tpu_custom_call.1} parent=47 // pred_check_branch
          %369 = sbr.rel (%p367) target = $region64
        $region63: #{tpu_custom_call.1} parent=47 // pred_region
          %370 = dma.done %s364, 16
        $region64: #{tpu_custom_call.1} parent=47 // pred_fallthru
          _
        // Predicated region
        $region65: #{tpu_custom_call.1} parent=47 // pred_check
          %p371 = pneg %p148
        $region66: #{tpu_custom_call.1} parent=47 // pred_check_branch
          %373 = sbr.rel (%p371) target = $region68
        $region67: #{tpu_custom_call.1} parent=47 // pred_region
          %374 = dma.done [#allocation10], 128
        $region68: #{tpu_custom_call.1} parent=47 // pred_fallthru
          _
        %s375 = sand.u32 %s36, 1
        %s376 = scalar_lea.sflag [#allocation4], %s375
        %s377 = sand.u32 %s36, 1
        %s378 = smul.addr %s377, 12
        %s379 = scalar_lea.vmem [#allocation3], %s378
        %p380 = pneg %p49
        %p381 = pneg %p46
        %s382 = sand.u32 %s28, 1
        %s383 = scalar_lea.sflag [#allocation7], %s382
        %s384 = sand.u32 %s62, 1
        %s385 = smul.addr %s384, 8
        %s386 = scalar_lea.vmem [#allocation6], %s385
        %p387 = pneg %p75
        %p388 = pneg %p72
        %s389 = sand.u32 %s28, 1
        %s390 = scalar_lea.sflag [#allocation7], %s389
        %s391 = sand.u32 %s88, 1
        %s392 = smul.addr %s391, 16
        %s393 = scalar_lea.vmem [#allocation8], %s392
        %p394 = pneg %p101
        %p395 = pneg %p98
        %s396 = sand.u32 %s28, 1
        %s397 = scalar_lea.sflag [#allocation10], %s396
        %s398 = sand.u32 %s114, 1
        %s399 = scalar_lea.vmem [#allocation9], %s398
        %p400 = pneg %p127
        %p401 = pneg %p124
        %p402 = pneg %p148
        %p403 = pneg %p145
        %p404 = pneg %p169
        %p405 = pneg %p166
        %p406 = pneg %p190
        %p407 = pneg %p187
        %p408 = pneg %p211
        %p409 = pneg %p208
        %p411 = scmp.eq.s32.totalorder %s28, 0
        // Predicated region
        $region69: #{tpu_custom_call.1} parent=47 // pred_check
          %p412 = pneg %p411
        $region70: #{tpu_custom_call.1} parent=47 // pred_check_branch
          %414 = sbr.rel (%p412) target = $region72
        $region71: #{tpu_custom_call.1} parent=47 // pred_region
          %415 = vst [vmem:[#allocation2] sm:$0xff] 0.0
          %416 = vst [vmem:[#allocation2 + $0x8] sm:$0xff] 0.0
        $region72: #{tpu_custom_call.1} parent=47 // pred_fallthru
          _
        %v417 = vld [vmem:[%s340] sm:$0xf]
        %v418 = vld [vmem:[%s340 + $0x4] sm:$0xf]
        %v419 = vld [vmem:[%s340 + $0x8] sm:$0xf]
        %v420 = vld [vmem:[%s358] sm:$0xf]
        %v421 = vld [vmem:[%s358 + $0x4] sm:$0xf]
        %v422 = vld [vmem:[%s358 + $0x8] sm:$0xf]
        %v423 = vld [vmem:[%s358 + $0xc] sm:$0xf]
        %v424 = vld [vmem:[%s366] sm:$0x1]
        %v426 = vlaneseq
        %v427 = vshrl.u32 %v426, 7
        %v428 = vsub.s32 0, %v427
        %v429 = vrot.slane %v424, %v428
        %v434 = vunpack.c.l.b16 %v417
        %v435 = vunpack.c.l.b16 %v418
        %v436 = vunpack.c.l.b16 %v419
        %v437 = vpack.c.b16 %v435, %v434
        %v438 = vpack.c.b16 %v436, %v436
        %v443 = vunpack.c.l.b16 %v420
        %v444 = vunpack.c.l.b16 %v421
        %v445 = vunpack.c.l.b16 %v422
        %v446 = vunpack.c.l.b16 %v423
        %v447 = vpack.c.b16 %v444, %v443
        %v448 = vpack.c.b16 %v446, %v445
        %vm451 = vcmask 261120
        %v453 = vsel %vm451, %v437, 0
        %v456 = vsel %vm451, %v438, 0
        %458 = vmatprep.subr.bf16.mxu0 0
        %459 = vmatpush1.bf16.msra.mxu0 %v447
        %460 = vmatprep.subr.bf16.mxu0 0
        %461 = vmatpush1.bf16.msra.mxu0 %v448
        %462 = vmatprep.subr.bf16.mxu0 0
        %463 = vmatpush1.bf16.msra.mxu0 0
        %464 = vmatprep.subr.bf16.mxu0 0
        %465 = vmatpush1.bf16.msra.mxu0 0
        %466 = vmatprep.subr.bf16.mxu0 0
        %467 = vmatpush1.bf16.msra.mxu0 0
        %468 = vmatprep.subr.bf16.mxu0 0
        %469 = vmatpush1.bf16.msra.mxu0 0
        %470 = vmatprep.subr.bf16.mxu0 0
        %471 = vmatpush1.bf16.msra.mxu0 0
        %472 = vmatprep.subr.bf16.mxu0 0
        %473 = vmatpush1.bf16.msra.mxu0 0
        %474 = vmatprep.subr.bf16.mxu0 0
        %475 = vmatpush1.bf16.msra.mxu0 0
        %476 = vmatprep.subr.bf16.mxu0 0
        %477 = vmatpush1.bf16.msra.mxu0 0
        %478 = vmatprep.subr.bf16.mxu0 0
        %479 = vmatpush1.bf16.msra.mxu0 0
        %480 = vmatprep.subr.bf16.mxu0 0
        %481 = vmatpush1.bf16.msra.mxu0 0
        %482 = vmatprep.subr.bf16.mxu0 0
        %483 = vmatpush1.bf16.msra.mxu0 0
        %484 = vmatprep.subr.bf16.mxu0 0
        %485 = vmatpush1.bf16.msra.mxu0 0
        %486 = vmatprep.subr.bf16.mxu0 0
        %487 = vmatpush1.bf16.msra.mxu0 0
        %488 = vmatprep.subr.bf16.mxu0 0
        %489 = vmatpush1.bf16.msra.mxu0 0
        %490 = vmatprep.mubr.bf16.mxu0 0
        %491 = vmatmul.mubr.bf16.gmra.mrb[0].mxu0 %v453
        %v492 = vpop.f32.mrb[0].mxu0
        %v493 = vadd.f32 %v429, %v492
        %v494 = vpop.f32.mrb[0].mxu0
        %v495 = vpop.f32.mrb[0].mxu0
        %v496 = vadd.f32 %v429, %v495
        %v497 = vpop.f32.mrb[0].mxu0
        %498 = vmatprep.mubr.bf16.mxu0 0
        %499 = vmatmul.mubr.bf16.gmra.mrb[0].mxu0 %v456
        %v500 = vpop.f32.mrb[0].mxu0
        %v501 = vadd.f32 %v429, %v500
        %v502 = vpop.f32.mrb[0].mxu0
        %v503 = vpop.f32.mrb[0].mxu0
        %v504 = vpop.f32.mrb[0].mxu0
        %505 = vdwg.mxu0
        %v506 = vld [vmem:[%s349] sm:$0xf]
        %v507 = vld [vmem:[%s349 + $0x4] sm:$0xf]
        %v508 = vunpack.c.l.bf16 %v506
        %v509 = vunpack.c.l.bf16 %v507
        %vm510 = vcmask 195584
        %v511 = vsel %vm510, %v508, 0.0
        %512 = vadd.xlane.f32.xlu0 %v511
        %v513 = vpop.xlane.xlu0 %512
        %v514 = vsel %vm510, %v509, 0.0
        %515 = vadd.xlane.f32.xlu0 %v514
        %v516 = vpop.xlane.xlu0 %515
        %v517 = vpack.c.bf16 %v496, %v493
        %v518 = vpack.c.bf16 %v501, %v501
        %v521 = vunpack.c.l.b16 %v506
        %v522 = vunpack.c.l.b16 %v507
        %v523 = vpack.c.b16 %v522, %v521
        %v525 = vsel %vm510, %v523, 0
        %vm527 = vcmask 1043456
        %v529 = vsel %vm527, %v518, 0
        %531 = vmatprep.subr.bf16.mxu0 0
        %532 = vmatpush1.bf16.msra.mxu0 %v517
        %533 = vmatprep.subr.bf16.mxu0 0
        %534 = vmatpush1.bf16.msra.mxu0 %v529
        %535 = vmatprep.subr.bf16.mxu0 0
        %536 = vmatpush1.bf16.msra.mxu0 0
        %537 = vmatprep.subr.bf16.mxu0 0
        %538 = vmatpush1.bf16.msra.mxu0 0
        %539 = vmatprep.subr.bf16.mxu0 0
        %540 = vmatpush1.bf16.msra.mxu0 0
        %541 = vmatprep.subr.bf16.mxu0 0
        %542 = vmatpush1.bf16.msra.mxu0 0
        %543 = vmatprep.subr.bf16.mxu0 0
        %544 = vmatpush1.bf16.msra.mxu0 0
        %545 = vmatprep.subr.bf16.mxu0 0
        %546 = vmatpush1.bf16.msra.mxu0 0
        %547 = vmatprep.subr.bf16.mxu0 0
        %548 = vmatpush1.bf16.msra.mxu0 0
        %549 = vmatprep.subr.bf16.mxu0 0
        %550 = vmatpush1.bf16.msra.mxu0 0
        %551 = vmatprep.subr.bf16.mxu0 0
        %552 = vmatpush1.bf16.msra.mxu0 0
        %553 = vmatprep.subr.bf16.mxu0 0
        %554 = vmatpush1.bf16.msra.mxu0 0
        %555 = vmatprep.subr.bf16.mxu0 0
        %556 = vmatpush1.bf16.msra.mxu0 0
        %557 = vmatprep.subr.bf16.mxu0 0
        %558 = vmatpush1.bf16.msra.mxu0 0
        %559 = vmatprep.subr.bf16.mxu0 0
        %560 = vmatpush1.bf16.msra.mxu0 0
        %561 = vmatprep.subr.bf16.mxu0 0
        %562 = vmatpush1.bf16.msra.mxu0 0
        %563 = vmatprep.mubr.bf16.mxu0 0
        %564 = vmatmul.mubr.bf16.gmra.mrb[0].mxu0 %v525
        %v565 = vpop.f32.mrb[0].mxu0
        %v566 = vadd.f32 0.0, %v565
        %v567 = vpop.f32.mrb[0].mxu0
        %v568 = vpop.f32.mrb[0].mxu0
        %v569 = vadd.f32 0.0, %v568
        %v570 = vpop.f32.mrb[0].mxu0
        %571 = vdwg.mxu0
        %v572 = vmax.f32 %v513, 1.0
        %v573 = vmax.f32 %v516, 1.0
        %v574 = vrcp.pop %v572
        %v575 = vrcp.pop %v573
        %v576 = vld [vmem:[#allocation2] sm:$0xff]
        %v577 = vld [vmem:[#allocation2 + $0x8] sm:$0xff]
        %vm578 = vcmp.gt.f32.partialorder %v513, 0.0
        %vm579 = vcmp.gt.f32.partialorder %v516, 0.0
        %v580 = vmul.f32 %v566, %v574
        %v581 = vmul.f32 %v569, %v575
        %v582 = vsel %vm578, 1, 0
        %v583 = vsel %vm579, 1, 0
        %vm584 = vcmp.eq.s32.totalorder %v582, 1
        %vm585 = vcmp.eq.s32.totalorder %v583, 1
        %v586 = vsel %vm584, %v580, 0.0
        %v587 = vsel %vm585, %v581, 0.0
        %v588 = vadd.f32 %v576, %v586
        %v589 = vadd.f32 %v577, %v587
        %590 = vst [vmem:[#allocation2] sm:$0xff] %v588
        %591 = vst [vmem:[#allocation2 + $0x8] sm:$0xff] %v589
        %p592 = scmp.eq.s32.totalorder %s28, 2
        // Predicated region
        $region73: #{tpu_custom_call.1} parent=47 // pred_check
          %p593 = pneg %p592
        $region74: #{tpu_custom_call.1} parent=47 // pred_check_branch
          %595 = sbr.rel (%p593) target = $region76
        $region75: #{tpu_custom_call.1} parent=47 // pred_region
          %v596 = vld [vmem:[#allocation2] sm:$0xff]
          %v597 = vld [vmem:[#allocation2 + $0x8] sm:$0xff]
          %v598 = vld [vmem:[#allocation11] sm:$0xf]
          %v599 = vld [vmem:[#allocation11 + $0x4] sm:$0xf]
          %v600 = vld [vmem:[%s5] sm:$0xf]
          %v601 = vld [vmem:[%s5 + $0x4] sm:$0xf]
          %v602 = vld [vmem:[%s5 + $0x8] sm:$0xf]
          %v603 = vld [vmem:[%s5 + $0xc] sm:$0xf]
          %v606 = vunpack.c.l.b16 %v598
          %v607 = vunpack.c.l.b16 %v599
          %v608 = vpack.c.b16 %v607, %v606
          %v613 = vunpack.c.l.b16 %v600
          %v614 = vunpack.c.l.b16 %v601
          %v615 = vunpack.c.l.b16 %v602
          %v616 = vunpack.c.l.b16 %v603
          %v617 = vpack.c.b16 %v614, %v613
          %v618 = vpack.c.b16 %v616, %v615
          %v622 = vsel %vm451, %v608, 0
          %624 = vmatprep.subr.bf16.mxu0 0
          %625 = vmatpush1.bf16.msra.mxu0 %v617
          %626 = vmatprep.subr.bf16.mxu0 0
          %627 = vmatpush1.bf16.msra.mxu0 %v618
          %628 = vmatprep.subr.bf16.mxu0 0
          %629 = vmatpush1.bf16.msra.mxu0 0
          %630 = vmatprep.subr.bf16.mxu0 0
          %631 = vmatpush1.bf16.msra.mxu0 0
          %632 = vmatprep.subr.bf16.mxu0 0
          %633 = vmatpush1.bf16.msra.mxu0 0
          %634 = vmatprep.subr.bf16.mxu0 0
          %635 = vmatpush1.bf16.msra.mxu0 0
          %636 = vmatprep.subr.bf16.mxu0 0
          %637 = vmatpush1.bf16.msra.mxu0 0
          %638 = vmatprep.subr.bf16.mxu0 0
          %639 = vmatpush1.bf16.msra.mxu0 0
          %640 = vmatprep.subr.bf16.mxu0 0
          %641 = vmatpush1.bf16.msra.mxu0 0
          %642 = vmatprep.subr.bf16.mxu0 0
          %643 = vmatpush1.bf16.msra.mxu0 0
          %644 = vmatprep.subr.bf16.mxu0 0
          %645 = vmatpush1.bf16.msra.mxu0 0
          %646 = vmatprep.subr.bf16.mxu0 0
          %647 = vmatpush1.bf16.msra.mxu0 0
          %648 = vmatprep.subr.bf16.mxu0 0
          %649 = vmatpush1.bf16.msra.mxu0 0
          %650 = vmatprep.subr.bf16.mxu0 0
          %651 = vmatpush1.bf16.msra.mxu0 0
          %652 = vmatprep.subr.bf16.mxu0 0
          %653 = vmatpush1.bf16.msra.mxu0 0
          %654 = vmatprep.subr.bf16.mxu0 0
          %655 = vmatpush1.bf16.msra.mxu0 0
          %656 = vmatprep.mubr.bf16.mxu0 0
          %657 = vmatmul.mubr.bf16.gmra.mrb[0].mxu0 %v622
          %v658 = vpop.f32.mrb[0].mxu0
          %v659 = vadd.f32 0.0, %v658
          %v660 = vpop.f32.mrb[0].mxu0
          %v661 = vpop.f32.mrb[0].mxu0
          %v662 = vadd.f32 0.0, %v661
          %v663 = vpop.f32.mrb[0].mxu0
          %664 = vdwg.mxu0
          %v665 = vadd.f32 %v596, %v659
          %v666 = vadd.f32 %v597, %v662
          %v667 = vld [vmem:[%s6] sm:$0x1]
          %v669 = vlaneseq
          %v670 = vshrl.u32 %v669, 7
          %v671 = vsub.s32 0, %v670
          %v672 = vrot.slane %v667, %v671
          %v674 = vadd.f32 %v665, %v672
          %v675 = vadd.f32 %v666, %v672
          %vm676 = vcmp.ge.f32.partialorder %v674, 0.0
          %vm677 = vcmp.ge.f32.partialorder %v675, 0.0
          %v678 = vmul.f32 %v674, 0.01
          %v679 = vmul.f32 %v675, 0.01
          %v680 = vsel %vm676, %v674, %v678
          %v681 = vsel %vm677, %v675, %v679
          %682 = vst [vmem:[#allocation12] sm:$0xff] %v680
          %683 = vst [vmem:[#allocation12 + $0x8] sm:$0xff] %v681
        $region76: #{tpu_custom_call.1} parent=47 // pred_fallthru
          _
        // Predicated region
        $region77: #{tpu_custom_call.1} parent=47 // pred_check
          %p684 = pneg %p208
        $region78: #{tpu_custom_call.1} parent=47 // pred_check_branch
          %686 = sbr.rel (%p684) target = $region80
        $region79: #{tpu_custom_call.1} parent=47 // pred_region
          %s688 = ssub.s32 256, 256
          %689 = vsyncadd [#allocation5], %s688
          %s690 = sshll.u32 [#allocation12], 4
          %s691 = int_to_ptr.vmem [resolvable:$true] %s690
          %696 = dma.vmem_to_hbm [thread:$0]  %s691, 256, %s7, [#allocation5], 128, 128, 8
        $region80: #{tpu_custom_call.1} parent=47 // pred_fallthru
          _
        // Predicated region
        $region81: #{tpu_custom_call.1} parent=47 // pred_check
          %p697 = pneg %p208
        $region82: #{tpu_custom_call.1} parent=47 // pred_check_branch
          %699 = sbr.rel (%p697) target = $region84
        $region83: #{tpu_custom_call.1} parent=47 // pred_region
          %700 = dma.done [#allocation5], 256
        $region84: #{tpu_custom_call.1} parent=47 // pred_fallthru
          _
      $region48: #{tpu_custom_call.1} parent=5 // pred_fallthru
        _
      %p701 = scmp.le.s32.totalorder 2, %s23
      // Predicated region
      $region85: #{tpu_custom_call.1} parent=5 // pred_check
        %p702 = pneg %p701
      $region86: #{tpu_custom_call.1} parent=5 // pred_check_branch
        %704 = sbr.rel (%p702) target = $region88
      $region87: #{tpu_custom_call.1} parent=5 // pred_region
        %s705 = ssub.s32 %s23, 2
      $region88: #{tpu_custom_call.1} parent=5 // pred_fallthru
        _
    $region6: #{tpu_custom_call.1} parent=1 // loop_footer
      %s27 = sadd.s32 1, %s23
    $region7: #{tpu_custom_call.1} parent=1 // loop_footer_branch
      %22 = sbr.rel target = $region3
    $region8: #{tpu_custom_call.1} parent=1 // loop_exit
      _
    %706 = vsyncpa [#allocation4], 1
    %s707 = scalar_lea.sflag [#allocation4], 1
    %708 = vsyncpa %s707, 1
    %709 = vsyncpa [#allocation7], 1
    %s710 = scalar_lea.sflag [#allocation7], 1
    %711 = vsyncpa %s710, 1
    %712 = vsyncpa [#allocation10], 1
    %s713 = scalar_lea.sflag [#allocation10], 1
    %714 = vsyncpa %s713, 1
    %715 = vsyncpa [#allocation5], 1
    %s716 = scalar_lea.sflag [#allocation5], 1
    %717 = vsyncpa %s716, 1

</llo_original>
